<compile_context>
chip_gen: v5e
topology: v5e:2x2
jax: 0.10.0
libtpu: 0.0.40
codegen_flags: <defaults>
</compile_context>

<pallas_src>
import jax
import jax.numpy as jnp
from jax.experimental import pallas as pl
from jax.experimental.pallas import tpu as pltpu


_TARGET_BLOCK_BYTES = 8 * 1024 * 1024   # ~8 MiB per pipelined block
_SPLIT_BYTES = 2 * 1024 * 1024          # above this, force grid >= 2 (v7x megacore)
_VMEM_LIMIT_BYTES = 48 * 1024 * 1024    # 2 in + 2 out buffers of 8 MiB fit easily


def _sigmoid_kernel(x_ref, o_ref):
    # sigmoid(x) = 0.5 * (tanh(x/2) + 1): ONE EUP transcendental per element,
    # plus cheap VPU mul/add.  Compute in f32 for accuracy, cast back on store.
    xf = x_ref[...].astype(jnp.float32)
    o_ref[...] = (0.5 * (jnp.tanh(0.5 * xf) + 1.0)).astype(o_ref.dtype)


def _pick_lanes(total: int):
    """Widest lane-dense last dim (multiple of 128) that divides total exactly."""
    for lanes in (1024, 512, 256, 128):
        if total % lanes == 0:
            return lanes
    return None


def sigmoid_pallas(x: jax.Array) -> jax.Array:
    """Elementwise sigmoid on an arbitrary-shaped tensor via a Pallas TPU kernel."""
    orig_shape = x.shape
    total = x.size
    itemsize = jnp.dtype(x.dtype).itemsize

    flat = x.reshape(-1)
    lanes = _pick_lanes(total)
    if lanes is None:
        # Rare ragged case (flat size not a multiple of 128): minimal pad.
        # Large conv/activation tensors essentially always hit the pad-free path.
        lanes = 128
        padded_total = pl.cdiv(total, lanes) * lanes
        flat = jnp.pad(flat, (0, padded_total - total))
    else:
        padded_total = total

    rows = padded_total // lanes
    x2d = flat.reshape(rows, lanes)

    # Biggest block that targets ~8 MiB, rounded to a multiple of 8 rows.
    row_bytes = lanes * itemsize
    tile_rows = max(8, (_TARGET_BLOCK_BYTES // row_bytes) // 8 * 8)
    block_rows = min(rows, tile_rows)

    # Ensure >= 2 grid steps for medium/large tensors so the "parallel" axis
    # can actually split across v7x's two TensorCores.
    if rows * row_bytes >= _SPLIT_BYTES:
        half_rows = ((pl.cdiv(rows, 2) + 7) // 8) * 8   # multiple of 8
        block_rows = min(block_rows, max(half_rows, 8))

    grid = (pl.cdiv(rows, block_rows),)

    out2d = pl.pallas_call(
        _sigmoid_kernel,
        out_shape=jax.ShapeDtypeStruct((rows, lanes), x.dtype),
        grid=grid,
        in_specs=[pl.BlockSpec((block_rows, lanes), lambda i: (i, 0))],
        out_specs=pl.BlockSpec((block_rows, lanes), lambda i: (i, 0)),
        compiler_params=pltpu.CompilerParams(
            dimension_semantics=("parallel",),   # megacore sharding on v7x
            vmem_limit_bytes=_VMEM_LIMIT_BYTES,
        ),
        cost_estimate=pl.CostEstimate(
            flops=3 * padded_total,
            transcendentals=padded_total,
            bytes_accessed=2 * padded_total * itemsize,
        ),
    )(x2d)

    out_flat = out2d.reshape(-1)
    if padded_total != total:
        out_flat = out_flat[:total]
    return out_flat.reshape(orig_shape)


if __name__ == "__main__":
    key = jax.random.PRNGKey(0)
    # Small NCHW input consistent with the module's conv-style expected input.
    x = jax.random.normal(key, (2, 4, 16, 16), dtype=jnp.float32)

    y = sigmoid_pallas(x)
    jax.block_until_ready(y)

    # Sanity check against plain JAX reference.
    y_ref = jax.nn.sigmoid(x)
    assert y.shape == x.shape and y.dtype == x.dtype
    assert jnp.allclose(y, y_ref, atol=1e-5, rtol=1e-5), "mismatch vs reference sigmoid"

    # Shape-robustness check: flat size not a multiple of 128 (pad fallback path).
    x_odd = jax.random.normal(key, (2, 3, 7, 7), dtype=jnp.float32)
    y_odd = sigmoid_pallas(x_odd)
    jax.block_until_ready(y_odd)
    assert jnp.allclose(y_odd, jax.nn.sigmoid(x_odd), atol=1e-5, rtol=1e-5), "odd-shape mismatch"

    print("KERNEL_OK")
</pallas_src>

<mosaic_0001>
module attributes {stable_mosaic.version = 11 : i64} {
  func.func @_sigmoid_kernel(%arg0: i32, %arg1: memref<2x1024xf32, #tpu.memory_space<vmem>>, %arg2: memref<2x1024xf32, #tpu.memory_space<vmem>>) attributes {dimension_semantics = [#tpu.dimension_semantics<parallel>], iteration_bounds = array<i64: 1>, scalar_prefetch = 0 : i64, scratch_operands = 0 : i64, tpu.core_type = #tpu.core_type<tc>, window_params = [{transform_indices = @transform_0, window_bounds = array<i64: 2, 1024>}, {transform_indices = @transform_1, window_bounds = array<i64: 2, 1024>}]} {
    %c0 = arith.constant 0 : index
    %c0_0 = arith.constant 0 : index
    %0 = vector.load %arg1[%c0, %c0_0] : memref<2x1024xf32, #tpu.memory_space<vmem>>, vector<2x1024xf32>
    %cst = arith.constant 5.000000e-01 : f32
    %1 = vector.broadcast %cst : f32 to vector<2x1024xf32>
    %2 = arith.mulf %1, %0 : vector<2x1024xf32>
    %3 = math.tanh %2 : vector<2x1024xf32>
    %cst_1 = arith.constant 1.000000e+00 : f32
    %4 = vector.broadcast %cst_1 : f32 to vector<2x1024xf32>
    %5 = arith.addf %3, %4 : vector<2x1024xf32>
    %cst_2 = arith.constant 5.000000e-01 : f32
    %6 = vector.broadcast %cst_2 : f32 to vector<2x1024xf32>
    %7 = arith.mulf %6, %5 : vector<2x1024xf32>
    %c0_3 = arith.constant 0 : index
    %c0_4 = arith.constant 0 : index
    %8 = vector.load %arg2[%c0_3, %c0_4] : memref<2x1024xf32, #tpu.memory_space<vmem>>, vector<2x1024xf32>
    tpu.vector_store %arg2[%c0_3, %c0_4], %7 {strides = array<i32>} : memref<2x1024xf32, #tpu.memory_space<vmem>>, vector<2x1024xf32>,
    return
  }
  func.func @transform_0(%arg0: i32) -> (i32, i32) {
    %c0_i32 = arith.constant 0 : i32
    %c0_i32_0 = arith.constant 0 : i32
    return %arg0, %c0_i32 : i32, i32
  }
  func.func @transform_1(%arg0: i32) -> (i32, i32) {
    %c0_i32 = arith.constant 0 : i32
    %c0_i32_0 = arith.constant 0 : i32
    return %arg0, %c0_i32 : i32, i32
  }
}

</mosaic_0001>

<llo_original>
// kernel: tpu_custom_call.1
$region0: #{tpu_custom_call.1}
  #allocation0 [shape = 'u32[]', space=smem, size = 0x4, offset = 0x4, fixed_abs, tag = 'smem constant byte address 0x4 - core index']
  #allocation1 [shape = 'u32[72,128]{1,0:T(1,128)}', space=vmem, size = 0x9000, scoped, tag = 'internal scratch']
  %s0 = inlined_call_operand.hbm [shape: f32[2,1024], index: 0, kind: input, shape index: {}]
  %s1 = inlined_call_operand.hbm [shape: f32[2,1024], index: 1, kind: output, shape index: {}]
  %s2 = sld [smem:[#allocation0]]
  $region18: #{tpu_custom_call.1} parent=0
    _
  %s4 = ssub.s32 1, %s2
  %s5 = scalar_select 0, %s4, %s2
  $region1: #{tpu_custom_call.1} parent=0
    #allocation2 [shape = 'u8[8192]{0}', space=vmem, size = 0x2000, scoped, tag = 'input window, operand 0, single buffered']
    #allocation3 [shape = 's32[1]{0}', space=sflag, size = 0x4, scoped, tag = 'scoped memory for tpu_custom_call.1']
    #allocation4 [shape = 's32[1]{0}', space=sflag, size = 0x4, scoped, tag = 'scoped memory for tpu_custom_call.1']
    #allocation5 [shape = 'u8[8192]{0}', space=vmem, size = 0x2000, scoped, tag = 'output window, operand 0, single buffered']
    %6 = vsyncpa [#allocation3], 0
    %7 = vsyncpa [#allocation4], 0
    // Predicated region
    $region2: #{tpu_custom_call.1} parent=1 // pred_check
      _
    $region3: #{tpu_custom_call.1} parent=1 // pred_check_branch
      %9 = sbr.rel (0) target = $region5
    $region4: #{tpu_custom_call.1} parent=1 // pred_region
      %11 = vsyncadd [#allocation3], 0
      %s13 = sshll.u32 %s0, 4
      %s14 = int_to_ptr.hbm [resolvable:$true] %s13
      %s15 = sshll.u32 [#allocation2], 4
      %s16 = int_to_ptr.vmem [resolvable:$true] %s15
      %18 = dma.hbm_to_vmem [thread:$0]  %s14, 256, %s16, [#allocation3]
    $region5: #{tpu_custom_call.1} parent=1 // pred_fallthru
      _
    // Predicated region
    $region6: #{tpu_custom_call.1} parent=1 // pred_check
      _
    $region7: #{tpu_custom_call.1} parent=1 // pred_check_branch
      %20 = sbr.rel (0) target = $region9
    $region8: #{tpu_custom_call.1} parent=1 // pred_region
      %22 = dma.done [#allocation3], 256
    $region9: #{tpu_custom_call.1} parent=1 // pred_fallthru
      _
    %v23 = vld [vmem:[#allocation2] sm:$0xff]
    %v24 = vld [vmem:[#allocation2 + $0x8] sm:$0xff]
    %v25 = vmul.f32 %v23, 0.5
    %v26 = vmul.f32 %v24, 0.5
    %v27 = vtanh.pop %v25
    %v28 = vtanh.pop %v26
    %v29 = vadd.f32 %v27, 1.0
    %v30 = vadd.f32 %v28, 1.0
    %v31 = vmul.f32 %v29, 0.5
    %v32 = vmul.f32 %v30, 0.5
    %33 = vst [vmem:[#allocation5] sm:$0xff] %v31
    %34 = vst [vmem:[#allocation5 + $0x8] sm:$0xff] %v32
    // Predicated region
    $region10: #{tpu_custom_call.1} parent=1 // pred_check
      _
    $region11: #{tpu_custom_call.1} parent=1 // pred_check_branch
      %36 = sbr.rel (0) target = $region13
    $region12: #{tpu_custom_call.1} parent=1 // pred_region
      %38 = vsyncadd [#allocation4], 0
      %s40 = sshll.u32 [#allocation5], 4
      %s41 = int_to_ptr.vmem [resolvable:$true] %s40
      %s42 = sshll.u32 %s1, 4
      %s43 = int_to_ptr.hbm [resolvable:$true] %s42
      %45 = dma.vmem_to_hbm [thread:$0]  %s41, 256, %s43, [#allocation4]
    $region13: #{tpu_custom_call.1} parent=1 // pred_fallthru
      _
    // Predicated region
    $region14: #{tpu_custom_call.1} parent=1 // pred_check
      _
    $region15: #{tpu_custom_call.1} parent=1 // pred_check_branch
      %47 = sbr.rel (0) target = $region17
    $region16: #{tpu_custom_call.1} parent=1 // pred_region
      %49 = dma.done [#allocation4], 256
    $region17: #{tpu_custom_call.1} parent=1 // pred_fallthru
      _
    %50 = vsyncpa [#allocation3], 1
    %51 = vsyncpa [#allocation4], 1

</llo_original>
